<compile_context>
chip_gen: v6e
topology: v6e:2x2x1
jax: 0.10.0
libtpu: 0.0.40
codegen_flags: <defaults>
</compile_context>

<pallas_src>
import jax
import jax.numpy as jnp
from jax.experimental import pallas as pl
from jax.experimental.pallas import tpu as pltpu

LANE = 128      # lane width of a vreg
SUBLANE = 8     # f32 sublane packing


def _round_up(n, m):
    return ((n + m - 1) // m) * m


def policy_mlp_kernel(x_ref, w1_ref, b1_ref, w2_ref, b2_ref, w3_ref, b3_ref, o_ref):
    """Fused fc1 -> relu -> fc2 -> relu -> fc3 for one batch block.

    Matmuls run on the MXU with bf16 operands and f32 accumulation; bias-add
    and ReLU are done in f32 on the VPU (safe on all generations incl. v5e).
    The final store is bf16 to halve the HBM writeback.
    """
    x = x_ref[...].astype(jnp.bfloat16)

    h1 = jnp.dot(x, w1_ref[...], preferred_element_type=jnp.float32) + b1_ref[...]
    h1 = jnp.maximum(h1, 0.0).astype(jnp.bfloat16)

    h2 = jnp.dot(h1, w2_ref[...], preferred_element_type=jnp.float32) + b2_ref[...]
    h2 = jnp.maximum(h2, 0.0).astype(jnp.bfloat16)

    out = jnp.dot(h2, w3_ref[...], preferred_element_type=jnp.float32) + b3_ref[...]
    o_ref[...] = out.astype(o_ref.dtype)   # bf16 store


def _reference_forward(x, params):
    """Pure-JAX forward mirroring the kernel's bf16-matmul / f32-accumulate path.

    Also used as the non-Pallas fast path for tiny batches, where a pallas_call
    would be pure fixed dispatch overhead.
    """
    def dense(a, w, b):
        return jnp.dot(a.astype(jnp.bfloat16), w,
                       preferred_element_type=jnp.float32) + b
    h1 = jnp.maximum(dense(x, params["w1"], params["b1"]), 0.0)
    h2 = jnp.maximum(dense(h1, params["w2"], params["b2"]), 0.0)
    out = dense(h2, params["w3"], params["b3"])
    return out[:, :params["out_dim"]]


def policy_network_forward(x, params, *, batch_block=4096, min_pallas_batch=64):
    """Run the policy MLP.

    x:      [batch, state_size] float32
    params: dict from init_policy_params (lane-padded bf16 weights, f32 biases)
    returns [batch, 2 * action_size] float32
    """
    batch, state_size = x.shape

    # Tiny-batch fast path: skip the Pallas dispatch entirely.
    if batch < min_pallas_batch:
        return _reference_forward(x, params)

    w1, b1 = params["w1"], params["b1"]
    w2, b2 = params["w2"], params["b2"]
    w3, b3 = params["w3"], params["b3"]
    out_dim = params["out_dim"]
    out_pad = w3.shape[1]

    # Batch tiling: large blocks (amortize per-step overhead), padded to a
    # sublane multiple so the (8, 128) block constraint always holds.
    rounded = _round_up(batch, SUBLANE)
    tb = min(batch_block, rounded)
    # Ensure >= 2 grid steps so v7x megacore can shard the "parallel" batch
    # axis over both TensorCores (harmless on single-TC v5e/v6e).
    if tb == rounded and rounded >= 2 * SUBLANE:
        tb = _round_up(rounded // 2, SUBLANE)
    padded_batch = _round_up(batch, tb)
    if padded_batch != batch:
        x = jnp.pad(x, ((0, padded_batch - batch), (0, 0)))
    grid = (padded_batch // tb,)

    x_spec = pl.BlockSpec((tb, state_size), lambda i: (i, 0))
    out_spec = pl.BlockSpec((tb, out_pad), lambda i: (i, 0))

    def const_spec(a):
        # Constant index_map: fetched once, stays VMEM-resident across all
        # grid steps; single-buffered so no dead second pipeline copy.
        return pl.BlockSpec(a.shape, lambda i: (0,) * a.ndim,
                            pipeline_mode=pl.Buffered(1))

    out = pl.pallas_call(
        policy_mlp_kernel,
        out_shape=jax.ShapeDtypeStruct((padded_batch, out_pad), jnp.bfloat16),
        grid=grid,
        in_specs=[x_spec,
                  const_spec(w1), const_spec(b1),
                  const_spec(w2), const_spec(b2),
                  const_spec(w3), const_spec(b3)],
        out_specs=out_spec,
        compiler_params=pltpu.CompilerParams(
            dimension_semantics=("parallel",),        # megacore-shardable
            vmem_limit_bytes=48 * 1024 * 1024),       # big blocks on v5e, safe on v7x
    )(x, w1, b1, w2, b2, w3, b3)

    # NOTE: perf-critical consumers should take `out` (padded bf16) directly so
    # this slice/cast fuses into the consumer; here we match the PyTorch
    # module's interface exactly.
    return out[:batch, :out_dim].astype(jnp.float32)


def init_policy_params(key, state_size, action_size, hidden=50):
    """PyTorch-style (uniform +/- 1/sqrt(fan_in)) init, stored lane-padded.

    Weights: [in, out] zero-padded so 'out' (and the hidden 'in') is a
    multiple of 128 lanes, cast to bf16 for the MXU.
    Biases:  [1, out_padded] f32, padded lanes exactly 0.
    """
    hidden_pad = _round_up(hidden, LANE)          # 50 -> 128
    out_dim = 2 * action_size
    out_pad = _round_up(out_dim, LANE)            # 8  -> 128

    def linear_init(k, fan_in, fan_out, in_store, out_store):
        kw, kb = jax.random.split(k)
        bound = 1.0 / jnp.sqrt(jnp.float32(fan_in))
        w = jax.random.uniform(kw, (fan_in, fan_out), jnp.float32, -bound, bound)
        b = jax.random.uniform(kb, (1, fan_out), jnp.float32, -bound, bound)
        w_pad = jnp.zeros((in_store, out_store), jnp.float32).at[:fan_in, :fan_out].set(w)
        b_pad = jnp.zeros((1, out_store), jnp.float32).at[:, :fan_out].set(b)
        return w_pad.astype(jnp.bfloat16), b_pad  # bf16 weights, f32 biases

    k1, k2, k3 = jax.random.split(key, 3)
    w1, b1 = linear_init(k1, state_size, hidden, state_size, hidden_pad)
    w2, b2 = linear_init(k2, hidden, hidden, hidden_pad, hidden_pad)
    w3, b3 = linear_init(k3, hidden, out_dim, hidden_pad, out_pad)
    return {"w1": w1, "b1": b1, "w2": w2, "b2": b2, "w3": w3, "b3": b3,
            "out_dim": out_dim}


if __name__ == "__main__":
    state_size = 8
    action_size = 4

    key = jax.random.PRNGKey(0)
    kx_small, kx_big, kp = jax.random.split(key, 3)
    params = init_policy_params(kp, state_size, action_size)

    # Tiny rollout batch -> non-Pallas fast path.
    x_small = jax.random.normal(kx_small, (2, state_size), jnp.float32)
    out_small = jax.block_until_ready(policy_network_forward(x_small, params))
    assert out_small.shape == (2, 2 * action_size)
    assert jnp.allclose(out_small, _reference_forward(x_small, params),
                        atol=2e-2, rtol=2e-2)

    # Stacked batch -> fused Pallas kernel (>= 2 grid steps, megacore-ready).
    batch = 512
    x_big = jax.random.normal(kx_big, (batch, state_size), jnp.float32)
    out_big = jax.block_until_ready(policy_network_forward(x_big, params))
    ref_big = _reference_forward(x_big, params)
    assert out_big.shape == (batch, 2 * action_size)
    max_err = float(jnp.max(jnp.abs(out_big - ref_big)))
    assert jnp.allclose(out_big, ref_big, atol=2e-2, rtol=2e-2), max_err

    print("KERNEL_OK")
</pallas_src>

<mosaic_0001>
module attributes {stable_mosaic.version = 11 : i64} {
  func.func @policy_mlp_kernel(%arg0: i32, %arg1: memref<256x8xf32, #tpu.memory_space<vmem>>, %arg2: memref<8x128xbf16, #tpu.memory_space<vmem>>, %arg3: memref<1x128xf32, #tpu.memory_space<vmem>>, %arg4: memref<128x128xbf16, #tpu.memory_space<vmem>>, %arg5: memref<1x128xf32, #tpu.memory_space<vmem>>, %arg6: memref<128x128xbf16, #tpu.memory_space<vmem>>, %arg7: memref<1x128xf32, #tpu.memory_space<vmem>>, %arg8: memref<256x128xbf16, #tpu.memory_space<vmem>>) attributes {dimension_semantics = [#tpu.dimension_semantics<parallel>], iteration_bounds = array<i64: 2>, scalar_prefetch = 0 : i64, scratch_operands = 0 : i64, tpu.core_type = #tpu.core_type<tc>, window_params = [{transform_indices = @transform_0, window_bounds = array<i64: 256, 8>}, {pipeline_mode = #tpu.pipeline_mode<synchronous>, transform_indices = @transform_1, window_bounds = array<i64: 8, 128>}, {pipeline_mode = #tpu.pipeline_mode<synchronous>, transform_indices = @transform_2, window_bounds = array<i64: 1, 128>}, {pipeline_mode = #tpu.pipeline_mode<synchronous>, transform_indices = @transform_3, window_bounds = array<i64: 128, 128>}, {pipeline_mode = #tpu.pipeline_mode<synchronous>, transform_indices = @transform_4, window_bounds = array<i64: 1, 128>}, {pipeline_mode = #tpu.pipeline_mode<synchronous>, transform_indices = @transform_5, window_bounds = array<i64: 128, 128>}, {pipeline_mode = #tpu.pipeline_mode<synchronous>, transform_indices = @transform_6, window_bounds = array<i64: 1, 128>}, {transform_indices = @transform_7, window_bounds = array<i64: 256, 128>}]} {
    %c0 = arith.constant 0 : index
    %c0_0 = arith.constant 0 : index
    %0 = vector.load %arg1[%c0, %c0_0] : memref<256x8xf32, #tpu.memory_space<vmem>>, vector<256x8xf32>
    %1 = arith.truncf %0 : vector<256x8xf32> to vector<256x8xbf16>
    %c0_1 = arith.constant 0 : index
    %c0_2 = arith.constant 0 : index
    %2 = vector.load %arg2[%c0_1, %c0_2] : memref<8x128xbf16, #tpu.memory_space<vmem>>, vector<8x128xbf16>
    %cst = arith.constant dense<0.000000e+00> : vector<256x128xf32>
    %3 = tpu.matmul %1, %2, %cst {dimension_numbers = #tpu.dot_dimension_numbers<[1], [0], [0], [1], [0, 0, 1, 1], [], []>} : vector<256x8xbf16>, vector<8x128xbf16>, vector<256x128xf32> -> vector<256x128xf32>
    %c0_3 = arith.constant 0 : index
    %c0_4 = arith.constant 0 : index
    %4 = vector.load %arg3[%c0_3, %c0_4] : memref<1x128xf32, #tpu.memory_space<vmem>>, vector<1x128xf32>
    %5 = vector.broadcast %4 : vector<1x128xf32> to vector<256x128xf32>
    %6 = arith.addf %3, %5 : vector<256x128xf32>
    %cst_5 = arith.constant 0.000000e+00 : f32
    %7 = vector.broadcast %cst_5 : f32 to vector<256x128xf32>
    %8 = arith.maximumf %6, %7 : vector<256x128xf32>
    %9 = arith.truncf %8 : vector<256x128xf32> to vector<256x128xbf16>
    %c0_6 = arith.constant 0 : index
    %c0_7 = arith.constant 0 : index
    %10 = vector.load %arg4[%c0_6, %c0_7] : memref<128x128xbf16, #tpu.memory_space<vmem>>, vector<128x128xbf16>
    %cst_8 = arith.constant dense<0.000000e+00> : vector<256x128xf32>
    %11 = tpu.matmul %9, %10, %cst_8 {dimension_numbers = #tpu.dot_dimension_numbers<[1], [0], [0], [1], [0, 0, 1, 1], [], []>} : vector<256x128xbf16>, vector<128x128xbf16>, vector<256x128xf32> -> vector<256x128xf32>
    %c0_9 = arith.constant 0 : index
    %c0_10 = arith.constant 0 : index
    %12 = vector.load %arg5[%c0_9, %c0_10] : memref<1x128xf32, #tpu.memory_space<vmem>>, vector<1x128xf32>
    %13 = vector.broadcast %12 : vector<1x128xf32> to vector<256x128xf32>
    %14 = arith.addf %11, %13 : vector<256x128xf32>
    %cst_11 = arith.constant 0.000000e+00 : f32
    %15 = vector.broadcast %cst_11 : f32 to vector<256x128xf32>
    %16 = arith.maximumf %14, %15 : vector<256x128xf32>
    %17 = arith.truncf %16 : vector<256x128xf32> to vector<256x128xbf16>
    %c0_12 = arith.constant 0 : index
    %c0_13 = arith.constant 0 : index
    %18 = vector.load %arg6[%c0_12, %c0_13] : memref<128x128xbf16, #tpu.memory_space<vmem>>, vector<128x128xbf16>
    %cst_14 = arith.constant dense<0.000000e+00> : vector<256x128xf32>
    %19 = tpu.matmul %17, %18, %cst_14 {dimension_numbers = #tpu.dot_dimension_numbers<[1], [0], [0], [1], [0, 0, 1, 1], [], []>} : vector<256x128xbf16>, vector<128x128xbf16>, vector<256x128xf32> -> vector<256x128xf32>
    %c0_15 = arith.constant 0 : index
    %c0_16 = arith.constant 0 : index
    %20 = vector.load %arg7[%c0_15, %c0_16] : memref<1x128xf32, #tpu.memory_space<vmem>>, vector<1x128xf32>
    %21 = vector.broadcast %20 : vector<1x128xf32> to vector<256x128xf32>
    %22 = arith.addf %19, %21 : vector<256x128xf32>
    %23 = arith.truncf %22 : vector<256x128xf32> to vector<256x128xbf16>
    %c0_17 = arith.constant 0 : index
    %c0_18 = arith.constant 0 : index
    %24 = vector.load %arg8[%c0_17, %c0_18] : memref<256x128xbf16, #tpu.memory_space<vmem>>, vector<256x128xbf16>
    tpu.vector_store %arg8[%c0_17, %c0_18], %23 {strides = array<i32>} : memref<256x128xbf16, #tpu.memory_space<vmem>>, vector<256x128xbf16>,
    return
  }
  func.func @transform_0(%arg0: i32) -> (i32, i32) {
    %c0_i32 = arith.constant 0 : i32
    %c0_i32_0 = arith.constant 0 : i32
    return %arg0, %c0_i32 : i32, i32
  }
  func.func @transform_1(%arg0: i32) -> (i32, i32) {
    %c0_i32 = arith.constant 0 : i32
    %c0_i32_0 = arith.constant 0 : i32
    %c0_i32_1 = arith.constant 0 : i32
    return %c0_i32, %c0_i32_0 : i32, i32
  }
  func.func @transform_2(%arg0: i32) -> (i32, i32) {
    %c0_i32 = arith.constant 0 : i32
    %c0_i32_0 = arith.constant 0 : i32
    %c0_i32_1 = arith.constant 0 : i32
    return %c0_i32, %c0_i32_0 : i32, i32
  }
  func.func @transform_3(%arg0: i32) -> (i32, i32) {
    %c0_i32 = arith.constant 0 : i32
    %c0_i32_0 = arith.constant 0 : i32
    %c0_i32_1 = arith.constant 0 : i32
    return %c0_i32, %c0_i32_0 : i32, i32
  }
  func.func @transform_4(%arg0: i32) -> (i32, i32) {
    %c0_i32 = arith.constant 0 : i32
    %c0_i32_0 = arith.constant 0 : i32
    %c0_i32_1 = arith.constant 0 : i32
    return %c0_i32, %c0_i32_0 : i32, i32
  }
  func.func @transform_5(%arg0: i32) -> (i32, i32) {
    %c0_i32 = arith.constant 0 : i32
    %c0_i32_0 = arith.constant 0 : i32
    %c0_i32_1 = arith.constant 0 : i32
    return %c0_i32, %c0_i32_0 : i32, i32
  }
  func.func @transform_6(%arg0: i32) -> (i32, i32) {
    %c0_i32 = arith.constant 0 : i32
    %c0_i32_0 = arith.constant 0 : i32
    %c0_i32_1 = arith.constant 0 : i32
    return %c0_i32, %c0_i32_0 : i32, i32
  }
  func.func @transform_7(%arg0: i32) -> (i32, i32) {
    %c0_i32 = arith.constant 0 : i32
    %c0_i32_0 = arith.constant 0 : i32
    return %arg0, %c0_i32 : i32, i32
  }
}

</mosaic_0001>

<llo_original>
// kernel: tpu_custom_call.1
$region0: #{tpu_custom_call.1}
  #allocation0 [shape = 'u32[]', space=smem, size = 0x4, offset = 0x4, fixed_abs, tag = 'smem constant byte address 0x4 - core index']
  #allocation1 [shape = 'u32[144,128]{1,0:T(1,128)}', space=vmem, size = 0x12000, scoped, tag = 'internal scratch']
  %s0 = inlined_call_operand.vmem [shape: f32[512,8], index: 0, kind: input, shape index: {}]
  %s1 = inlined_call_operand.vmem [shape: bf16[8,128], index: 1, kind: input, shape index: {}]
  %s2 = inlined_call_operand.vmem [shape: f32[1,128], index: 2, kind: input, shape index: {}]
  %s3 = inlined_call_operand.vmem [shape: bf16[128,128], index: 3, kind: input, shape index: {}]
  %s4 = inlined_call_operand.vmem [shape: f32[1,128], index: 4, kind: input, shape index: {}]
  %s5 = inlined_call_operand.vmem [shape: bf16[128,128], index: 5, kind: input, shape index: {}]
  %s6 = inlined_call_operand.vmem [shape: f32[1,128], index: 6, kind: input, shape index: {}]
  %s7 = inlined_call_operand.hbm [shape: bf16[512,128], index: 7, kind: output, shape index: {}]
  %s8 = sld [smem:[#allocation0]]
  $region61: #{tpu_custom_call.1} parent=0
    _
  %s10 = ssub.s32 1, %s8
  %s11 = scalar_select 0, %s10, %s8
  $region1: #{tpu_custom_call.1} parent=0
    #allocation2 [shape = 'u8[131072]{0}', space=vmem, size = 0x20000, scoped, tag = 'output window, operand 0']
    #allocation3 [shape = 's32[2]{0}', space=sflag, size = 0x8, scoped, tag = 'scoped memory for tpu_custom_call.1']
    %12 = vsyncpa [#allocation3], 0
    %s13 = scalar_lea.sflag [#allocation3], 1
    %14 = vsyncpa %s13, 0
    loop: start=0, step=1, limit=4
    $region2: #{tpu_custom_call.1} parent=1 // loop_pre_header
      _
    $region3: #{tpu_custom_call.1} parent=1 // loop_header
      %s16 = sphi 0, %s20
      %p17 = scmp.ge.s32.totalorder %s16, 4
      %s26 = sphi 0, %s28
      %s29 = sphi 0, %s26
      %s30 = sphi 0, %s29
      %s46 = sphi 0, %s30
      %s50 = sphi 0, %s50
      %s52 = sphi 0, %s50
      %s53 = sphi 0, %s52
      %s67 = sphi 0, %s53
      %s71 = sphi 0, %s71
      %s73 = sphi 0, %s71
      %s74 = sphi 0, %s73
      %s88 = sphi 0, %s74
      %s92 = sphi 0, %s92
      %s94 = sphi 0, %s92
      %s95 = sphi 0, %s94
      %s109 = sphi 0, %s95
      %s113 = sphi 0, %s113
      %s115 = sphi 0, %s113
      %s116 = sphi 0, %s115
      %s130 = sphi 0, %s116
      %s134 = sphi 0, %s134
      %s136 = sphi 0, %s134
      %s137 = sphi 0, %s136
      %s151 = sphi 0, %s137
      %s155 = sphi 0, %s155
      %s157 = sphi 0, %s155
      %s158 = sphi 0, %s157
      %s172 = sphi 0, %s158
      %s178 = sphi 0, %s180
      %s181 = sphi 0, %s178
      %s182 = sphi 0, %s181
      %s198 = sphi 0, %s182
    $region4: #{tpu_custom_call.1} parent=1 // loop_header_branch
      %19 = sbr.rel (%p17) target = $region8
    $region5: #{tpu_custom_call.1} parent=1 // loop_body
      %s21 = ssub.s32 %s16, 1
      %s22 = ssub.s32 %s16, 2
      %s23 = sadd.s32 %s16, 1
      %s24 = ssub.s32 %s16, %s23
      %p25 = scmp.eq.s32.totalorder %s24, 0
      %s27 = sadd.s32 %s26, 1
      %s28 = scalar_select %p25, %s26, %s27
      %p31 = pneg %p25
      %p32 = scmp.eq.s32.totalorder %s16, 1
      %p33 = por %p31, %p32
      %p34 = scmp.ne.s32.totalorder %s26, %s29
      %p35 = scmp.eq.s32.totalorder %s16, 0
      %p36 = por %p34, %p35
      %p37 = scmp.ne.s32.totalorder %s26, %s29
      %p38 = scmp.eq.s32.totalorder %s21, 1
      %p39 = por %p37, %p38
      %p40 = scmp.ne.s32.totalorder %s29, %s30
      %p41 = scmp.eq.s32.totalorder %s21, 0
      %p42 = por %p40, %p41
      %p43 = scmp.ne.s32.totalorder %s29, %s30
      %p44 = scmp.eq.s32.totalorder %s22, 1
      %p45 = por %p43, %p44
      %p47 = scmp.ne.s32.totalorder %s30, %s46
      %p48 = scmp.eq.s32.totalorder %s22, 0
      %p49 = por %p47, %p48
      %s51 = sadd.s32 %s50, 1
      %p54 = scmp.eq.s32.totalorder %s16, 1
      %p55 = scmp.ne.s32.totalorder %s50, %s52
      %p56 = scmp.eq.s32.totalorder %s16, 0
      %p57 = por %p55, %p56
      %p58 = scmp.ne.s32.totalorder %s50, %s52
      %p59 = scmp.eq.s32.totalorder %s21, 1
      %p60 = por %p58, %p59
      %p61 = scmp.ne.s32.totalorder %s52, %s53
      %p62 = scmp.eq.s32.totalorder %s21, 0
      %p63 = por %p61, %p62
      %p64 = scmp.ne.s32.totalorder %s52, %s53
      %p65 = scmp.eq.s32.totalorder %s22, 1
      %p66 = por %p64, %p65
      %p68 = scmp.ne.s32.totalorder %s53, %s67
      %p69 = scmp.eq.s32.totalorder %s22, 0
      %p70 = por %p68, %p69
      %s72 = sadd.s32 %s71, 1
      %p75 = scmp.eq.s32.totalorder %s16, 1
      %p76 = scmp.ne.s32.totalorder %s71, %s73
      %p77 = scmp.eq.s32.totalorder %s16, 0
      %p78 = por %p76, %p77
      %p79 = scmp.ne.s32.totalorder %s71, %s73
      %p80 = scmp.eq.s32.totalorder %s21, 1
      %p81 = por %p79, %p80
      %p82 = scmp.ne.s32.totalorder %s73, %s74
      %p83 = scmp.eq.s32.totalorder %s21, 0
      %p84 = por %p82, %p83
      %p85 = scmp.ne.s32.totalorder %s73, %s74
      %p86 = scmp.eq.s32.totalorder %s22, 1
      %p87 = por %p85, %p86
      %p89 = scmp.ne.s32.totalorder %s74, %s88
      %p90 = scmp.eq.s32.totalorder %s22, 0
      %p91 = por %p89, %p90
      %s93 = sadd.s32 %s92, 1
      %p96 = scmp.eq.s32.totalorder %s16, 1
      %p97 = scmp.ne.s32.totalorder %s92, %s94
      %p98 = scmp.eq.s32.totalorder %s16, 0
      %p99 = por %p97, %p98
      %p100 = scmp.ne.s32.totalorder %s92, %s94
      %p101 = scmp.eq.s32.totalorder %s21, 1
      %p102 = por %p100, %p101
      %p103 = scmp.ne.s32.totalorder %s94, %s95
      %p104 = scmp.eq.s32.totalorder %s21, 0
      %p105 = por %p103, %p104
      %p106 = scmp.ne.s32.totalorder %s94, %s95
      %p107 = scmp.eq.s32.totalorder %s22, 1
      %p108 = por %p106, %p107
      %p110 = scmp.ne.s32.totalorder %s95, %s109
      %p111 = scmp.eq.s32.totalorder %s22, 0
      %p112 = por %p110, %p111
      %s114 = sadd.s32 %s113, 1
      %p117 = scmp.eq.s32.totalorder %s16, 1
      %p118 = scmp.ne.s32.totalorder %s113, %s115
      %p119 = scmp.eq.s32.totalorder %s16, 0
      %p120 = por %p118, %p119
      %p121 = scmp.ne.s32.totalorder %s113, %s115
      %p122 = scmp.eq.s32.totalorder %s21, 1
      %p123 = por %p121, %p122
      %p124 = scmp.ne.s32.totalorder %s115, %s116
      %p125 = scmp.eq.s32.totalorder %s21, 0
      %p126 = por %p124, %p125
      %p127 = scmp.ne.s32.totalorder %s115, %s116
      %p128 = scmp.eq.s32.totalorder %s22, 1
      %p129 = por %p127, %p128
      %p131 = scmp.ne.s32.totalorder %s116, %s130
      %p132 = scmp.eq.s32.totalorder %s22, 0
      %p133 = por %p131, %p132
      %s135 = sadd.s32 %s134, 1
      %p138 = scmp.eq.s32.totalorder %s16, 1
      %p139 = scmp.ne.s32.totalorder %s134, %s136
      %p140 = scmp.eq.s32.totalorder %s16, 0
      %p141 = por %p139, %p140
      %p142 = scmp.ne.s32.totalorder %s134, %s136
      %p143 = scmp.eq.s32.totalorder %s21, 1
      %p144 = por %p142, %p143
      %p145 = scmp.ne.s32.totalorder %s136, %s137
      %p146 = scmp.eq.s32.totalorder %s21, 0
      %p147 = por %p145, %p146
      %p148 = scmp.ne.s32.totalorder %s136, %s137
      %p149 = scmp.eq.s32.totalorder %s22, 1
      %p150 = por %p148, %p149
      %p152 = scmp.ne.s32.totalorder %s137, %s151
      %p153 = scmp.eq.s32.totalorder %s22, 0
      %p154 = por %p152, %p153
      %s156 = sadd.s32 %s155, 1
      %p159 = scmp.eq.s32.totalorder %s16, 1
      %p160 = scmp.ne.s32.totalorder %s155, %s157
      %p161 = scmp.eq.s32.totalorder %s16, 0
      %p162 = por %p160, %p161
      %p163 = scmp.ne.s32.totalorder %s155, %s157
      %p164 = scmp.eq.s32.totalorder %s21, 1
      %p165 = por %p163, %p164
      %p166 = scmp.ne.s32.totalorder %s157, %s158
      %p167 = scmp.eq.s32.totalorder %s21, 0
      %p168 = por %p166, %p167
      %p169 = scmp.ne.s32.totalorder %s157, %s158
      %p170 = scmp.eq.s32.totalorder %s22, 1
      %p171 = por %p169, %p170
      %p173 = scmp.ne.s32.totalorder %s158, %s172
      %p174 = scmp.eq.s32.totalorder %s22, 0
      %p175 = por %p173, %p174
      %s176 = ssub.s32 %s16, %s23
      %p177 = scmp.eq.s32.totalorder %s176, 0
      %s179 = sadd.s32 %s178, 1
      %s180 = scalar_select %p177, %s178, %s179
      %p183 = pneg %p177
      %p184 = scmp.eq.s32.totalorder %s16, 1
      %p185 = por %p183, %p184
      %p186 = scmp.ne.s32.totalorder %s178, %s181
      %p187 = scmp.eq.s32.totalorder %s16, 0
      %p188 = por %p186, %p187
      %p189 = scmp.ne.s32.totalorder %s178, %s181
      %p190 = scmp.eq.s32.totalorder %s21, 1
      %p191 = por %p189, %p190
      %p192 = scmp.ne.s32.totalorder %s181, %s182
      %p193 = scmp.eq.s32.totalorder %s21, 0
      %p194 = por %p192, %p193
      %p195 = scmp.ne.s32.totalorder %s181, %s182
      %p196 = scmp.eq.s32.totalorder %s22, 1
      %p197 = por %p195, %p196
      %p199 = scmp.ne.s32.totalorder %s182, %s198
      %p200 = scmp.eq.s32.totalorder %s22, 0
      %p201 = por %p199, %p200
      %p202 = scmp.le.s32.totalorder 1, %s16
      %p203 = scmp.lt.s32.totalorder %s16, 3
      %p204 = pnand %p202, %p203
      %p205 = pneg %p204
      // Predicated region
      $region9: #{tpu_custom_call.1} parent=5 // pred_check
        _
      $region10: #{tpu_custom_call.1} parent=5 // pred_check_branch
        %207 = sbr.rel (%p204) target = $region12
      $region11: #{tpu_custom_call.1} parent=5 // pred_region
        %s208 = ssub.s32 %s16, 1
        // Predicated region
        $region13: #{tpu_custom_call.1} parent=11 // pred_check
          %p209 = pneg %p63
        $region14: #{tpu_custom_call.1} parent=11 // pred_check_branch
          %211 = sbr.rel (%p209) target = $region16
        $region15: #{tpu_custom_call.1} parent=11 // pred_region
          _
        $region16: #{tpu_custom_call.1} parent=11 // pred_fallthru
          _
        // Predicated region
        $region17: #{tpu_custom_call.1} parent=11 // pred_check
          %p212 = pneg %p84
        $region18: #{tpu_custom_call.1} parent=11 // pred_check_branch
          %214 = sbr.rel (%p212) target = $region20
        $region19: #{tpu_custom_call.1} parent=11 // pred_region
          _
        $region20: #{tpu_custom_call.1} parent=11 // pred_fallthru
          _
        // Predicated region
        $region21: #{tpu_custom_call.1} parent=11 // pred_check
          %p215 = pneg %p105
        $region22: #{tpu_custom_call.1} parent=11 // pred_check_branch
          %217 = sbr.rel (%p215) target = $region24
        $region23: #{tpu_custom_call.1} parent=11 // pred_region
          _
        $region24: #{tpu_custom_call.1} parent=11 // pred_fallthru
          _
        // Predicated region
        $region25: #{tpu_custom_call.1} parent=11 // pred_check
          %p218 = pneg %p126
        $region26: #{tpu_custom_call.1} parent=11 // pred_check_branch
          %220 = sbr.rel (%p218) target = $region28
        $region27: #{tpu_custom_call.1} parent=11 // pred_region
          _
        $region28: #{tpu_custom_call.1} parent=11 // pred_fallthru
          _
        // Predicated region
        $region29: #{tpu_custom_call.1} parent=11 // pred_check
          %p221 = pneg %p147
        $region30: #{tpu_custom_call.1} parent=11 // pred_check_branch
          %223 = sbr.rel (%p221) target = $region32
        $region31: #{tpu_custom_call.1} parent=11 // pred_region
          _
        $region32: #{tpu_custom_call.1} parent=11 // pred_fallthru
          _
        // Predicated region
        $region33: #{tpu_custom_call.1} parent=11 // pred_check
          %p224 = pneg %p168
        $region34: #{tpu_custom_call.1} parent=11 // pred_check_branch
          %226 = sbr.rel (%p224) target = $region36
        $region35: #{tpu_custom_call.1} parent=11 // pred_region
          _
        $region36: #{tpu_custom_call.1} parent=11 // pred_fallthru
          _
      $region12: #{tpu_custom_call.1} parent=5 // pred_fallthru
        _
      %p227 = scmp.lt.s32.totalorder %s16, 2
      // Predicated region
      $region37: #{tpu_custom_call.1} parent=5 // pred_check
        %p228 = pneg %p227
      $region38: #{tpu_custom_call.1} parent=5 // pred_check_branch
        %230 = sbr.rel (%p228) target = $region40
      $region39: #{tpu_custom_call.1} parent=5 // pred_region
        // Predicated region
        $region41: #{tpu_custom_call.1} parent=39 // pred_check
          %p231 = pneg %p36
        $region42: #{tpu_custom_call.1} parent=39 // pred_check_branch
          %233 = sbr.rel (%p231) target = $region44
        $region43: #{tpu_custom_call.1} parent=39 // pred_region
          %s234 = smul.u32 32, %s16
          %p235 = scmp.lt.s32.totalorder %s234, 63
          %s236 = scalar_select %p235, %s234, 63
          %s237 = smul.addr %s236, 8
          %s238 = scalar_lea.vmem %s0, %s237
          %s239 = smul.u32 32, %s16
        $region44: #{tpu_custom_call.1} parent=39 // pred_fallthru
          _
      $region40: #{tpu_custom_call.1} parent=5 // pred_fallthru
        _
      %p240 = scmp.le.s32.totalorder 1, %s16
      %p241 = scmp.lt.s32.totalorder %s16, 3
      %p242 = pnand %p240, %p241
      %p243 = pneg %p242
      // Predicated region
      $region45: #{tpu_custom_call.1} parent=5 // pred_check
        _
      $region46: #{tpu_custom_call.1} parent=5 // pred_check_branch
        %245 = sbr.rel (%p242) target = $region48
      $region47: #{tpu_custom_call.1} parent=5 // pred_region
        %s246 = ssub.s32 %s16, 1
        %s247 = smul.u32 32, %s21
        %p248 = scmp.lt.s32.totalorder %s247, 63
        %s249 = scalar_select %p248, %s247, 63
        %s250 = smul.addr %s249, 8
        %s251 = scalar_lea.vmem %s0, %s250
        %p252 = pneg %p42
        %p253 = pneg %p39
        %p254 = pneg %p63
        %p255 = pneg %p60
        %p256 = pneg %p84
        %p257 = pneg %p81
        %p258 = pneg %p105
        %p259 = pneg %p102
        %p260 = pneg %p126
        %p261 = pneg %p123
        %p262 = pneg %p147
        %p263 = pneg %p144
        %p264 = pneg %p168
        %p265 = pneg %p165
        %p266 = pneg %p194
        %p267 = pneg %p191
        %s268 = sand.u32 %s181, 1
        %s269 = scalar_lea.sflag [#allocation3], %s268
        %s270 = sand.u32 %s181, 1
        %s271 = smul.addr %s270, 128
        %s272 = scalar_lea.vmem [#allocation2], %s271
        %s273 = smul.u32 32, %s21
        %p274 = scmp.lt.s32.totalorder %s273, 63
        %s275 = scalar_select %p274, %s273, 63
        %s276 = smul.addr %s275, 8
        %s277 = scalar_lea.vmem %s0, %s276
        %s278 = smul.u32 32, %s21
        %s279 = smul.u32 32, %s21
        %v281 = vld [vmem:[%s277] sm:$0xff]
        %v282 = vld [vmem:[%s277 + $0x8] sm:$0xff]
        %v283 = vld [vmem:[%s277 + $0x10] sm:$0xff]
        %v284 = vld [vmem:[%s277 + $0x18] sm:$0xff]
        %v285 = vld [vmem:[%s277 + $0x20] sm:$0xff]
        %v286 = vld [vmem:[%s277 + $0x28] sm:$0xff]
        %v287 = vld [vmem:[%s277 + $0x30] sm:$0xff]
        %v288 = vld [vmem:[%s277 + $0x38] sm:$0xff]
        %v289 = vld [vmem:[%s277 + $0x40] sm:$0xff]
        %v290 = vld [vmem:[%s277 + $0x48] sm:$0xff]
        %v291 = vld [vmem:[%s277 + $0x50] sm:$0xff]
        %v292 = vld [vmem:[%s277 + $0x58] sm:$0xff]
        %v293 = vld [vmem:[%s277 + $0x60] sm:$0xff]
        %v294 = vld [vmem:[%s277 + $0x68] sm:$0xff]
        %v295 = vld [vmem:[%s277 + $0x70] sm:$0xff]
        %v296 = vld [vmem:[%s277 + $0x78] sm:$0xff]
        %v297 = vld [vmem:[%s277 + $0x80] sm:$0xff]
        %v298 = vld [vmem:[%s277 + $0x88] sm:$0xff]
        %v299 = vld [vmem:[%s277 + $0x90] sm:$0xff]
        %v300 = vld [vmem:[%s277 + $0x98] sm:$0xff]
        %v301 = vld [vmem:[%s277 + $0xa0] sm:$0xff]
        %v302 = vld [vmem:[%s277 + $0xa8] sm:$0xff]
        %v303 = vld [vmem:[%s277 + $0xb0] sm:$0xff]
        %v304 = vld [vmem:[%s277 + $0xb8] sm:$0xff]
        %v305 = vld [vmem:[%s277 + $0xc0] sm:$0xff]
        %v306 = vld [vmem:[%s277 + $0xc8] sm:$0xff]
        %v307 = vld [vmem:[%s277 + $0xd0] sm:$0xff]
        %v308 = vld [vmem:[%s277 + $0xd8] sm:$0xff]
        %v309 = vld [vmem:[%s277 + $0xe0] sm:$0xff]
        %v310 = vld [vmem:[%s277 + $0xe8] sm:$0xff]
        %v311 = vld [vmem:[%s277 + $0xf0] sm:$0xff]
        %v312 = vld [vmem:[%s277 + $0xf8] sm:$0xff]
        %v313 = vpack.c.bf16 %v282, %v281
        %v314 = vpack.c.bf16 %v284, %v283
        %v315 = vpack.c.bf16 %v286, %v285
        %v316 = vpack.c.bf16 %v288, %v287
        %v317 = vpack.c.bf16 %v290, %v289
        %v318 = vpack.c.bf16 %v292, %v291
        %v319 = vpack.c.bf16 %v294, %v293
        %v320 = vpack.c.bf16 %v296, %v295
        %v321 = vpack.c.bf16 %v298, %v297
        %v322 = vpack.c.bf16 %v300, %v299
        %v323 = vpack.c.bf16 %v302, %v301
        %v324 = vpack.c.bf16 %v304, %v303
        %v325 = vpack.c.bf16 %v306, %v305
        %v326 = vpack.c.bf16 %v308, %v307
        %v327 = vpack.c.bf16 %v310, %v309
        %v328 = vpack.c.bf16 %v312, %v311
        %v329 = vld [vmem:[%s1] sm:$0xf]
        %v330 = vld [vmem:[%s2] sm:$0x1]
        %v332 = vlaneseq
        %v333 = vshrl.u32 %v332, 7
        %v334 = vsub.s32 0, %v333
        %v335 = vrot.slane %v330, %v334
        %vm337 = vcmask 64512
        %v339 = vsel %vm337, %v313, 0
        %v342 = vsel %vm337, %v314, 0
        %v345 = vsel %vm337, %v315, 0
        %v348 = vsel %vm337, %v316, 0
        %v351 = vsel %vm337, %v317, 0
        %v354 = vsel %vm337, %v318, 0
        %v357 = vsel %vm337, %v319, 0
        %v360 = vsel %vm337, %v320, 0
        %v363 = vsel %vm337, %v321, 0
        %v366 = vsel %vm337, %v322, 0
        %v369 = vsel %vm337, %v323, 0
        %v372 = vsel %vm337, %v324, 0
        %v375 = vsel %vm337, %v325, 0
        %v378 = vsel %vm337, %v326, 0
        %v381 = vsel %vm337, %v327, 0
        %v384 = vsel %vm337, %v328, 0
        %vm386 = vcmask 1043456
        %v388 = vsel %vm386, %v329, 0
        %390 = vmatprep.subr.bf16.mxu0 0
        %391 = vmatpush1.bf16.msra.mxu0 0
        %392 = vmatprep.subr.bf16.mxu0 0
        %393 = vmatpush1.bf16.msra.mxu0 0
        %394 = vmatprep.subr.bf16.mxu0 0
        %395 = vmatpush1.bf16.msra.mxu0 0
        %396 = vmatprep.subr.bf16.mxu0 0
        %397 = vmatpush1.bf16.msra.mxu0 0
        %398 = vmatprep.subr.bf16.mxu0 0
        %399 = vmatpush1.bf16.msra.mxu0 0
        %400 = vmatprep.subr.bf16.mxu0 0
        %401 = vmatpush1.bf16.msra.mxu0 0
        %402 = vmatprep.subr.bf16.mxu0 0
        %403 = vmatpush1.bf16.msra.mxu0 0
        %404 = vmatprep.subr.bf16.mxu0 0
        %405 = vmatpush1.bf16.msra.mxu0 %v388
        %406 = vmatprep.subr.bf16.mxu0 0
        %407 = vmatpush2.bf16.msra.mxu0 0
        %408 = vmatprep.subr.bf16.mxu0 0
        %409 = vmatpush2.bf16.msra.mxu0 0
        %410 = vmatprep.subr.bf16.mxu0 0
        %411 = vmatpush2.bf16.msra.mxu0 0
        %412 = vmatprep.subr.bf16.mxu0 0
        %413 = vmatpush2.bf16.msra.mxu0 0
        %414 = vmatprep.subr.bf16.mxu0 0
        %415 = vmatpush2.bf16.msra.mxu0 0
        %416 = vmatprep.subr.bf16.mxu0 0
        %417 = vmatpush2.bf16.msra.mxu0 0
        %418 = vmatprep.subr.bf16.mxu0 0
        %419 = vmatpush2.bf16.msra.mxu0 0
        %420 = vmatprep.subr.bf16.mxu0 0
        %421 = vmatpush2.bf16.msra.mxu0 0
        %422 = vmatprep.mubr.bf16.mxu0 0
        %423 = vmatmul.mubr.bf16.gmra.mxu0 %v339
        %v424 = vpop.f32.mrf.mxu0
        %v425 = vadd.f32 %v335, %v424
        %v426 = vpop.f32.mrf.mxu0
        %v427 = vpop.f32.mrf.mxu0
        %v428 = vadd.f32 %v335, %v427
        %v429 = vpop.f32.mrf.mxu0
        %430 = vmatprep.mubr.bf16.mxu0 0
        %431 = vmatmul.mubr.bf16.gmra.mxu0 %v342
        %v432 = vpop.f32.mrf.mxu0
        %v433 = vadd.f32 %v335, %v432
        %v434 = vpop.f32.mrf.mxu0
        %v435 = vpop.f32.mrf.mxu0
        %v436 = vadd.f32 %v335, %v435
        %v437 = vpop.f32.mrf.mxu0
        %438 = vmatprep.mubr.bf16.mxu0 0
        %439 = vmatmul.mubr.bf16.gmra.mxu0 %v345
        %v440 = vpop.f32.mrf.mxu0
        %v441 = vadd.f32 %v335, %v440
        %v442 = vpop.f32.mrf.mxu0
        %v443 = vpop.f32.mrf.mxu0
        %v444 = vadd.f32 %v335, %v443
        %v445 = vpop.f32.mrf.mxu0
        %446 = vmatprep.mubr.bf16.mxu0 0
        %447 = vmatmul.mubr.bf16.gmra.mxu0 %v348
        %v448 = vpop.f32.mrf.mxu0
        %v449 = vadd.f32 %v335, %v448
        %v450 = vpop.f32.mrf.mxu0
        %v451 = vpop.f32.mrf.mxu0
        %v452 = vadd.f32 %v335, %v451
        %v453 = vpop.f32.mrf.mxu0
        %454 = vmatprep.mubr.bf16.mxu0 0
        %455 = vmatmul.mubr.bf16.gmra.mxu0 %v351
        %v456 = vpop.f32.mrf.mxu0
        %v457 = vadd.f32 %v335, %v456
        %v458 = vpop.f32.mrf.mxu0
        %v459 = vpop.f32.mrf.mxu0
        %v460 = vadd.f32 %v335, %v459
        %v461 = vpop.f32.mrf.mxu0
        %462 = vmatprep.mubr.bf16.mxu0 0
        %463 = vmatmul.mubr.bf16.gmra.mxu0 %v354
        %v464 = vpop.f32.mrf.mxu0
        %v465 = vadd.f32 %v335, %v464
        %v466 = vpop.f32.mrf.mxu0
        %v467 = vpop.f32.mrf.mxu0
        %v468 = vadd.f32 %v335, %v467
        %v469 = vpop.f32.mrf.mxu0
        %470 = vmatprep.mubr.bf16.mxu0 0
        %471 = vmatmul.mubr.bf16.gmra.mxu0 %v357
        %v472 = vpop.f32.mrf.mxu0
        %v473 = vadd.f32 %v335, %v472
        %v474 = vpop.f32.mrf.mxu0
        %v475 = vpop.f32.mrf.mxu0
        %v476 = vadd.f32 %v335, %v475
        %v477 = vpop.f32.mrf.mxu0
        %478 = vmatprep.mubr.bf16.mxu0 0
        %479 = vmatmul.mubr.bf16.gmra.mxu0 %v360
        %v480 = vpop.f32.mrf.mxu0
        %v481 = vadd.f32 %v335, %v480
        %v482 = vpop.f32.mrf.mxu0
        %v483 = vpop.f32.mrf.mxu0
        %v484 = vadd.f32 %v335, %v483
        %v485 = vpop.f32.mrf.mxu0
        %486 = vmatprep.mubr.bf16.mxu0 0
        %487 = vmatmul.mubr.bf16.gmra.mxu0 %v363
        %v488 = vpop.f32.mrf.mxu0
        %v489 = vadd.f32 %v335, %v488
        %v490 = vpop.f32.mrf.mxu0
        %v491 = vpop.f32.mrf.mxu0
        %v492 = vadd.f32 %v335, %v491
        %v493 = vpop.f32.mrf.mxu0
        %494 = vmatprep.mubr.bf16.mxu0 0
        %495 = vmatmul.mubr.bf16.gmra.mxu0 %v366
        %v496 = vpop.f32.mrf.mxu0
        %v497 = vadd.f32 %v335, %v496
        %v498 = vpop.f32.mrf.mxu0
        %v499 = vpop.f32.mrf.mxu0
        %v500 = vadd.f32 %v335, %v499
        %v501 = vpop.f32.mrf.mxu0
        %502 = vmatprep.mubr.bf16.mxu0 0
        %503 = vmatmul.mubr.bf16.gmra.mxu0 %v369
        %v504 = vpop.f32.mrf.mxu0
        %v505 = vadd.f32 %v335, %v504
        %v506 = vpop.f32.mrf.mxu0
        %v507 = vpop.f32.mrf.mxu0
        %v508 = vadd.f32 %v335, %v507
        %v509 = vpop.f32.mrf.mxu0
        %510 = vmatprep.mubr.bf16.mxu0 0
        %511 = vmatmul.mubr.bf16.gmra.mxu0 %v372
        %v512 = vpop.f32.mrf.mxu0
        %v513 = vadd.f32 %v335, %v512
        %v514 = vpop.f32.mrf.mxu0
        %v515 = vpop.f32.mrf.mxu0
        %v516 = vadd.f32 %v335, %v515
        %v517 = vpop.f32.mrf.mxu0
        %518 = vmatprep.mubr.bf16.mxu0 0
        %519 = vmatmul.mubr.bf16.gmra.mxu0 %v375
        %v520 = vpop.f32.mrf.mxu0
        %v521 = vadd.f32 %v335, %v520
        %v522 = vpop.f32.mrf.mxu0
        %v523 = vpop.f32.mrf.mxu0
        %v524 = vadd.f32 %v335, %v523
        %v525 = vpop.f32.mrf.mxu0
        %526 = vmatprep.mubr.bf16.mxu0 0
        %527 = vmatmul.mubr.bf16.gmra.mxu0 %v378
        %v528 = vpop.f32.mrf.mxu0
        %v529 = vadd.f32 %v335, %v528
        %v530 = vpop.f32.mrf.mxu0
        %v531 = vpop.f32.mrf.mxu0
        %v532 = vadd.f32 %v335, %v531
        %v533 = vpop.f32.mrf.mxu0
        %534 = vmatprep.mubr.bf16.mxu0 0
        %535 = vmatmul.mubr.bf16.gmra.mxu0 %v381
        %v536 = vpop.f32.mrf.mxu0
        %v537 = vadd.f32 %v335, %v536
        %v538 = vpop.f32.mrf.mxu0
        %v539 = vpop.f32.mrf.mxu0
        %v540 = vadd.f32 %v335, %v539
        %v541 = vpop.f32.mrf.mxu0
        %542 = vmatprep.mubr.bf16.mxu0 0
        %543 = vmatmul.mubr.bf16.gmra.mxu0 %v384
        %v544 = vpop.f32.mrf.mxu0
        %v545 = vadd.f32 %v335, %v544
        %v546 = vpop.f32.mrf.mxu0
        %v547 = vpop.f32.mrf.mxu0
        %v548 = vadd.f32 %v335, %v547
        %v549 = vpop.f32.mrf.mxu0
        %550 = vdwg.mxu0
        %v551 = vmax.f32 %v425, 0.0
        %v552 = vmax.f32 %v428, 0.0
        %v553 = vmax.f32 %v433, 0.0
        %v554 = vmax.f32 %v436, 0.0
        %v555 = vmax.f32 %v441, 0.0
        %v556 = vmax.f32 %v444, 0.0
        %v557 = vmax.f32 %v449, 0.0
        %v558 = vmax.f32 %v452, 0.0
        %v559 = vmax.f32 %v457, 0.0
        %v560 = vmax.f32 %v460, 0.0
        %v561 = vmax.f32 %v465, 0.0
        %v562 = vmax.f32 %v468, 0.0
        %v563 = vmax.f32 %v473, 0.0
        %v564 = vmax.f32 %v476, 0.0
        %v565 = vmax.f32 %v481, 0.0
        %v566 = vmax.f32 %v484, 0.0
        %v567 = vmax.f32 %v489, 0.0
        %v568 = vmax.f32 %v492, 0.0
        %v569 = vmax.f32 %v497, 0.0
        %v570 = vmax.f32 %v500, 0.0
        %v571 = vmax.f32 %v505, 0.0
        %v572 = vmax.f32 %v508, 0.0
        %v573 = vmax.f32 %v513, 0.0
        %v574 = vmax.f32 %v516, 0.0
        %v575 = vmax.f32 %v521, 0.0
        %v576 = vmax.f32 %v524, 0.0
        %v577 = vmax.f32 %v529, 0.0
        %v578 = vmax.f32 %v532, 0.0
        %v579 = vmax.f32 %v537, 0.0
        %v580 = vmax.f32 %v540, 0.0
        %v581 = vmax.f32 %v545, 0.0
        %v582 = vmax.f32 %v548, 0.0
        %v583 = vpack.c.bf16 %v552, %v551
        %v584 = vpack.c.bf16 %v554, %v553
        %v585 = vpack.c.bf16 %v556, %v555
        %v586 = vpack.c.bf16 %v558, %v557
        %v587 = vpack.c.bf16 %v560, %v559
        %v588 = vpack.c.bf16 %v562, %v561
        %v589 = vpack.c.bf16 %v564, %v563
        %v590 = vpack.c.bf16 %v566, %v565
        %v591 = vpack.c.bf16 %v568, %v567
        %v592 = vpack.c.bf16 %v570, %v569
        %v593 = vpack.c.bf16 %v572, %v571
        %v594 = vpack.c.bf16 %v574, %v573
        %v595 = vpack.c.bf16 %v576, %v575
        %v596 = vpack.c.bf16 %v578, %v577
        %v597 = vpack.c.bf16 %v580, %v579
        %v598 = vpack.c.bf16 %v582, %v581
        %v599 = vld [vmem:[%s3] sm:$0xf]
        %v600 = vld [vmem:[%s3 + $0x4] sm:$0xf]
        %v601 = vld [vmem:[%s3 + $0x8] sm:$0xf]
        %v602 = vld [vmem:[%s3 + $0xc] sm:$0xf]
        %v603 = vld [vmem:[%s3 + $0x10] sm:$0xf]
        %v604 = vld [vmem:[%s3 + $0x14] sm:$0xf]
        %v605 = vld [vmem:[%s3 + $0x18] sm:$0xf]
        %v606 = vld [vmem:[%s3 + $0x1c] sm:$0xf]
        %v607 = vld [vmem:[%s3 + $0x20] sm:$0xf]
        %v608 = vld [vmem:[%s3 + $0x24] sm:$0xf]
        %v609 = vld [vmem:[%s3 + $0x28] sm:$0xf]
        %v610 = vld [vmem:[%s3 + $0x2c] sm:$0xf]
        %v611 = vld [vmem:[%s3 + $0x30] sm:$0xf]
        %v612 = vld [vmem:[%s3 + $0x34] sm:$0xf]
        %v613 = vld [vmem:[%s3 + $0x38] sm:$0xf]
        %v614 = vld [vmem:[%s3 + $0x3c] sm:$0xf]
        %v615 = vld [vmem:[%s4] sm:$0x1]
        %v617 = vlaneseq
        %v618 = vshrl.u32 %v617, 7
        %v619 = vsub.s32 0, %v618
        %v620 = vrot.slane %v615, %v619
        %v638 = vunpack.c.l.b16 %v599
        %v639 = vunpack.c.l.b16 %v600
        %v640 = vunpack.c.l.b16 %v601
        %v641 = vunpack.c.l.b16 %v602
        %v642 = vunpack.c.l.b16 %v603
        %v643 = vunpack.c.l.b16 %v604
        %v644 = vunpack.c.l.b16 %v605
        %v645 = vunpack.c.l.b16 %v606
        %v646 = vunpack.c.l.b16 %v607
        %v647 = vunpack.c.l.b16 %v608
        %v648 = vunpack.c.l.b16 %v609
        %v649 = vunpack.c.l.b16 %v610
        %v650 = vunpack.c.l.b16 %v611
        %v651 = vunpack.c.l.b16 %v612
        %v652 = vunpack.c.l.b16 %v613
        %v653 = vunpack.c.l.b16 %v614
        %v654 = vpack.c.b16 %v639, %v638
        %v655 = vpack.c.b16 %v641, %v640
        %v656 = vpack.c.b16 %v643, %v642
        %v657 = vpack.c.b16 %v645, %v644
        %v658 = vpack.c.b16 %v647, %v646
        %v659 = vpack.c.b16 %v649, %v648
        %v660 = vpack.c.b16 %v651, %v650
        %v661 = vpack.c.b16 %v653, %v652
        %670 = vmatprep.subr.bf16.mxu0 0
        %671 = vmatpush1.bf16.msra.mxu0 %v661
        %672 = vmatprep.subr.bf16.mxu0 0
        %673 = vmatpush1.bf16.msra.mxu0 %v660
        %674 = vmatprep.subr.bf16.mxu0 0
        %675 = vmatpush1.bf16.msra.mxu0 %v659
        %676 = vmatprep.subr.bf16.mxu0 0
        %677 = vmatpush1.bf16.msra.mxu0 %v658
        %678 = vmatprep.subr.bf16.mxu0 0
        %679 = vmatpush1.bf16.msra.mxu0 %v657
        %680 = vmatprep.subr.bf16.mxu0 0
        %681 = vmatpush1.bf16.msra.mxu0 %v656
        %682 = vmatprep.subr.bf16.mxu0 0
        %683 = vmatpush1.bf16.msra.mxu0 %v655
        %684 = vmatprep.subr.bf16.mxu0 0
        %685 = vmatpush1.bf16.msra.mxu0 %v654
        %686 = vmatprep.subr.bf16.mxu0 0
        %687 = vmatpush2.bf16.msra.mxu0 0
        %688 = vmatprep.subr.bf16.mxu0 0
        %689 = vmatpush2.bf16.msra.mxu0 0
        %690 = vmatprep.subr.bf16.mxu0 0
        %691 = vmatpush2.bf16.msra.mxu0 0
        %692 = vmatprep.subr.bf16.mxu0 0
        %693 = vmatpush2.bf16.msra.mxu0 0
        %694 = vmatprep.subr.bf16.mxu0 0
        %695 = vmatpush2.bf16.msra.mxu0 0
        %696 = vmatprep.subr.bf16.mxu0 0
        %697 = vmatpush2.bf16.msra.mxu0 0
        %698 = vmatprep.subr.bf16.mxu0 0
        %699 = vmatpush2.bf16.msra.mxu0 0
        %700 = vmatprep.subr.bf16.mxu0 0
        %701 = vmatpush2.bf16.msra.mxu0 0
        %702 = vmatprep.mubr.bf16.mxu0 0
        %703 = vmatmul.mubr.bf16.gmra.mxu0 %v583
        %v704 = vpop.f32.mrf.mxu0
        %v705 = vadd.f32 %v620, %v704
        %v706 = vpop.f32.mrf.mxu0
        %v707 = vpop.f32.mrf.mxu0
        %v708 = vadd.f32 %v620, %v707
        %v709 = vpop.f32.mrf.mxu0
        %710 = vmatprep.mubr.bf16.mxu0 0
        %711 = vmatmul.mubr.bf16.gmra.mxu0 %v584
        %v712 = vpop.f32.mrf.mxu0
        %v713 = vadd.f32 %v620, %v712
        %v714 = vpop.f32.mrf.mxu0
        %v715 = vpop.f32.mrf.mxu0
        %v716 = vadd.f32 %v620, %v715
        %v717 = vpop.f32.mrf.mxu0
        %718 = vmatprep.mubr.bf16.mxu0 0
        %719 = vmatmul.mubr.bf16.gmra.mxu0 %v585
        %v720 = vpop.f32.mrf.mxu0
        %v721 = vadd.f32 %v620, %v720
        %v722 = vpop.f32.mrf.mxu0
        %v723 = vpop.f32.mrf.mxu0
        %v724 = vadd.f32 %v620, %v723
        %v725 = vpop.f32.mrf.mxu0
        %726 = vmatprep.mubr.bf16.mxu0 0
        %727 = vmatmul.mubr.bf16.gmra.mxu0 %v586
        %v728 = vpop.f32.mrf.mxu0
        %v729 = vadd.f32 %v620, %v728
        %v730 = vpop.f32.mrf.mxu0
        %v731 = vpop.f32.mrf.mxu0
        %v732 = vadd.f32 %v620, %v731
        %v733 = vpop.f32.mrf.mxu0
        %734 = vmatprep.mubr.bf16.mxu0 0
        %735 = vmatmul.mubr.bf16.gmra.mxu0 %v587
        %v736 = vpop.f32.mrf.mxu0
        %v737 = vadd.f32 %v620, %v736
        %v738 = vpop.f32.mrf.mxu0
        %v739 = vpop.f32.mrf.mxu0
        %v740 = vadd.f32 %v620, %v739
        %v741 = vpop.f32.mrf.mxu0
        %742 = vmatprep.mubr.bf16.mxu0 0
        %743 = vmatmul.mubr.bf16.gmra.mxu0 %v588
        %v744 = vpop.f32.mrf.mxu0
        %v745 = vadd.f32 %v620, %v744
        %v746 = vpop.f32.mrf.mxu0
        %v747 = vpop.f32.mrf.mxu0
        %v748 = vadd.f32 %v620, %v747
        %v749 = vpop.f32.mrf.mxu0
        %750 = vmatprep.mubr.bf16.mxu0 0
        %751 = vmatmul.mubr.bf16.gmra.mxu0 %v589
        %v752 = vpop.f32.mrf.mxu0
        %v753 = vadd.f32 %v620, %v752
        %v754 = vpop.f32.mrf.mxu0
        %v755 = vpop.f32.mrf.mxu0
        %v756 = vadd.f32 %v620, %v755
        %v757 = vpop.f32.mrf.mxu0
        %758 = vmatprep.mubr.bf16.mxu0 0
        %759 = vmatmul.mubr.bf16.gmra.mxu0 %v590
        %v760 = vpop.f32.mrf.mxu0
        %v761 = vadd.f32 %v620, %v760
        %v762 = vpop.f32.mrf.mxu0
        %v763 = vpop.f32.mrf.mxu0
        %v764 = vadd.f32 %v620, %v763
        %v765 = vpop.f32.mrf.mxu0
        %766 = vmatprep.mubr.bf16.mxu0 0
        %767 = vmatmul.mubr.bf16.gmra.mxu0 %v591
        %v768 = vpop.f32.mrf.mxu0
        %v769 = vadd.f32 %v620, %v768
        %v770 = vpop.f32.mrf.mxu0
        %v771 = vpop.f32.mrf.mxu0
        %v772 = vadd.f32 %v620, %v771
        %v773 = vpop.f32.mrf.mxu0
        %774 = vmatprep.mubr.bf16.mxu0 0
        %775 = vmatmul.mubr.bf16.gmra.mxu0 %v592
        %v776 = vpop.f32.mrf.mxu0
        %v777 = vadd.f32 %v620, %v776
        %v778 = vpop.f32.mrf.mxu0
        %v779 = vpop.f32.mrf.mxu0
        %v780 = vadd.f32 %v620, %v779
        %v781 = vpop.f32.mrf.mxu0
        %782 = vmatprep.mubr.bf16.mxu0 0
        %783 = vmatmul.mubr.bf16.gmra.mxu0 %v593
        %v784 = vpop.f32.mrf.mxu0
        %v785 = vadd.f32 %v620, %v784
        %v786 = vpop.f32.mrf.mxu0
        %v787 = vpop.f32.mrf.mxu0
        %v788 = vadd.f32 %v620, %v787
        %v789 = vpop.f32.mrf.mxu0
        %790 = vmatprep.mubr.bf16.mxu0 0
        %791 = vmatmul.mubr.bf16.gmra.mxu0 %v594
        %v792 = vpop.f32.mrf.mxu0
        %v793 = vadd.f32 %v620, %v792
        %v794 = vpop.f32.mrf.mxu0
        %v795 = vpop.f32.mrf.mxu0
        %v796 = vadd.f32 %v620, %v795
        %v797 = vpop.f32.mrf.mxu0
        %798 = vmatprep.mubr.bf16.mxu0 0
        %799 = vmatmul.mubr.bf16.gmra.mxu0 %v595
        %v800 = vpop.f32.mrf.mxu0
        %v801 = vadd.f32 %v620, %v800
        %v802 = vpop.f32.mrf.mxu0
        %v803 = vpop.f32.mrf.mxu0
        %v804 = vadd.f32 %v620, %v803
        %v805 = vpop.f32.mrf.mxu0
        %806 = vmatprep.mubr.bf16.mxu0 0
        %807 = vmatmul.mubr.bf16.gmra.mxu0 %v596
        %v808 = vpop.f32.mrf.mxu0
        %v809 = vadd.f32 %v620, %v808
        %v810 = vpop.f32.mrf.mxu0
        %v811 = vpop.f32.mrf.mxu0
        %v812 = vadd.f32 %v620, %v811
        %v813 = vpop.f32.mrf.mxu0
        %814 = vmatprep.mubr.bf16.mxu0 0
        %815 = vmatmul.mubr.bf16.gmra.mxu0 %v597
        %v816 = vpop.f32.mrf.mxu0
        %v817 = vadd.f32 %v620, %v816
        %v818 = vpop.f32.mrf.mxu0
        %v819 = vpop.f32.mrf.mxu0
        %v820 = vadd.f32 %v620, %v819
        %v821 = vpop.f32.mrf.mxu0
        %822 = vmatprep.mubr.bf16.mxu0 0
        %823 = vmatmul.mubr.bf16.gmra.mxu0 %v598
        %v824 = vpop.f32.mrf.mxu0
        %v825 = vadd.f32 %v620, %v824
        %v826 = vpop.f32.mrf.mxu0
        %v827 = vpop.f32.mrf.mxu0
        %v828 = vadd.f32 %v620, %v827
        %v829 = vpop.f32.mrf.mxu0
        %830 = vdwg.mxu0
        %v831 = vmax.f32 %v705, 0.0
        %v832 = vmax.f32 %v708, 0.0
        %v833 = vmax.f32 %v713, 0.0
        %v834 = vmax.f32 %v716, 0.0
        %v835 = vmax.f32 %v721, 0.0
        %v836 = vmax.f32 %v724, 0.0
        %v837 = vmax.f32 %v729, 0.0
        %v838 = vmax.f32 %v732, 0.0
        %v839 = vmax.f32 %v737, 0.0
        %v840 = vmax.f32 %v740, 0.0
        %v841 = vmax.f32 %v745, 0.0
        %v842 = vmax.f32 %v748, 0.0
        %v843 = vmax.f32 %v753, 0.0
        %v844 = vmax.f32 %v756, 0.0
        %v845 = vmax.f32 %v761, 0.0
        %v846 = vmax.f32 %v764, 0.0
        %v847 = vmax.f32 %v769, 0.0
        %v848 = vmax.f32 %v772, 0.0
        %v849 = vmax.f32 %v777, 0.0
        %v850 = vmax.f32 %v780, 0.0
        %v851 = vmax.f32 %v785, 0.0
        %v852 = vmax.f32 %v788, 0.0
        %v853 = vmax.f32 %v793, 0.0
        %v854 = vmax.f32 %v796, 0.0
        %v855 = vmax.f32 %v801, 0.0
        %v856 = vmax.f32 %v804, 0.0
        %v857 = vmax.f32 %v809, 0.0
        %v858 = vmax.f32 %v812, 0.0
        %v859 = vmax.f32 %v817, 0.0
        %v860 = vmax.f32 %v820, 0.0
        %v861 = vmax.f32 %v825, 0.0
        %v862 = vmax.f32 %v828, 0.0
        %v863 = vpack.c.bf16 %v832, %v831
        %v864 = vpack.c.bf16 %v834, %v833
        %v865 = vpack.c.bf16 %v836, %v835
        %v866 = vpack.c.bf16 %v838, %v837
        %v867 = vpack.c.bf16 %v840, %v839
        %v868 = vpack.c.bf16 %v842, %v841
        %v869 = vpack.c.bf16 %v844, %v843
        %v870 = vpack.c.bf16 %v846, %v845
        %v871 = vpack.c.bf16 %v848, %v847
        %v872 = vpack.c.bf16 %v850, %v849
        %v873 = vpack.c.bf16 %v852, %v851
        %v874 = vpack.c.bf16 %v854, %v853
        %v875 = vpack.c.bf16 %v856, %v855
        %v876 = vpack.c.bf16 %v858, %v857
        %v877 = vpack.c.bf16 %v860, %v859
        %v878 = vpack.c.bf16 %v862, %v861
        %v879 = vld [vmem:[%s5] sm:$0xf]
        %v880 = vld [vmem:[%s5 + $0x4] sm:$0xf]
        %v881 = vld [vmem:[%s5 + $0x8] sm:$0xf]
        %v882 = vld [vmem:[%s5 + $0xc] sm:$0xf]
        %v883 = vld [vmem:[%s5 + $0x10] sm:$0xf]
        %v884 = vld [vmem:[%s5 + $0x14] sm:$0xf]
        %v885 = vld [vmem:[%s5 + $0x18] sm:$0xf]
        %v886 = vld [vmem:[%s5 + $0x1c] sm:$0xf]
        %v887 = vld [vmem:[%s5 + $0x20] sm:$0xf]
        %v888 = vld [vmem:[%s5 + $0x24] sm:$0xf]
        %v889 = vld [vmem:[%s5 + $0x28] sm:$0xf]
        %v890 = vld [vmem:[%s5 + $0x2c] sm:$0xf]
        %v891 = vld [vmem:[%s5 + $0x30] sm:$0xf]
        %v892 = vld [vmem:[%s5 + $0x34] sm:$0xf]
        %v893 = vld [vmem:[%s5 + $0x38] sm:$0xf]
        %v894 = vld [vmem:[%s5 + $0x3c] sm:$0xf]
        %v895 = vld [vmem:[%s6] sm:$0x1]
        %v897 = vlaneseq
        %v898 = vshrl.u32 %v897, 7
        %v899 = vsub.s32 0, %v898
        %v900 = vrot.slane %v895, %v899
        %v918 = vunpack.c.l.b16 %v879
        %v919 = vunpack.c.l.b16 %v880
        %v920 = vunpack.c.l.b16 %v881
        %v921 = vunpack.c.l.b16 %v882
        %v922 = vunpack.c.l.b16 %v883
        %v923 = vunpack.c.l.b16 %v884
        %v924 = vunpack.c.l.b16 %v885
        %v925 = vunpack.c.l.b16 %v886
        %v926 = vunpack.c.l.b16 %v887
        %v927 = vunpack.c.l.b16 %v888
        %v928 = vunpack.c.l.b16 %v889
        %v929 = vunpack.c.l.b16 %v890
        %v930 = vunpack.c.l.b16 %v891
        %v931 = vunpack.c.l.b16 %v892
        %v932 = vunpack.c.l.b16 %v893
        %v933 = vunpack.c.l.b16 %v894
        %v934 = vpack.c.b16 %v919, %v918
        %v935 = vpack.c.b16 %v921, %v920
        %v936 = vpack.c.b16 %v923, %v922
        %v937 = vpack.c.b16 %v925, %v924
        %v938 = vpack.c.b16 %v927, %v926
        %v939 = vpack.c.b16 %v929, %v928
        %v940 = vpack.c.b16 %v931, %v930
        %v941 = vpack.c.b16 %v933, %v932
        %950 = vmatprep.subr.bf16.mxu0 0
        %951 = vmatpush1.bf16.msra.mxu0 %v941
        %952 = vmatprep.subr.bf16.mxu0 0
        %953 = vmatpush1.bf16.msra.mxu0 %v940
        %954 = vmatprep.subr.bf16.mxu0 0
        %955 = vmatpush1.bf16.msra.mxu0 %v939
        %956 = vmatprep.subr.bf16.mxu0 0
        %957 = vmatpush1.bf16.msra.mxu0 %v938
        %958 = vmatprep.subr.bf16.mxu0 0
        %959 = vmatpush1.bf16.msra.mxu0 %v937
        %960 = vmatprep.subr.bf16.mxu0 0
        %961 = vmatpush1.bf16.msra.mxu0 %v936
        %962 = vmatprep.subr.bf16.mxu0 0
        %963 = vmatpush1.bf16.msra.mxu0 %v935
        %964 = vmatprep.subr.bf16.mxu0 0
        %965 = vmatpush1.bf16.msra.mxu0 %v934
        %966 = vmatprep.subr.bf16.mxu0 0
        %967 = vmatpush2.bf16.msra.mxu0 0
        %968 = vmatprep.subr.bf16.mxu0 0
        %969 = vmatpush2.bf16.msra.mxu0 0
        %970 = vmatprep.subr.bf16.mxu0 0
        %971 = vmatpush2.bf16.msra.mxu0 0
        %972 = vmatprep.subr.bf16.mxu0 0
        %973 = vmatpush2.bf16.msra.mxu0 0
        %974 = vmatprep.subr.bf16.mxu0 0
        %975 = vmatpush2.bf16.msra.mxu0 0
        %976 = vmatprep.subr.bf16.mxu0 0
        %977 = vmatpush2.bf16.msra.mxu0 0
        %978 = vmatprep.subr.bf16.mxu0 0
        %979 = vmatpush2.bf16.msra.mxu0 0
        %980 = vmatprep.subr.bf16.mxu0 0
        %981 = vmatpush2.bf16.msra.mxu0 0
        %982 = vmatprep.mubr.bf16.mxu0 0
        %983 = vmatmul.mubr.bf16.gmra.mxu0 %v863
        %v984 = vpop.f32.mrf.mxu0
        %v985 = vadd.f32 %v900, %v984
        %v986 = vpop.f32.mrf.mxu0
        %v987 = vpop.f32.mrf.mxu0
        %v988 = vadd.f32 %v900, %v987
        %v989 = vpop.f32.mrf.mxu0
        %990 = vmatprep.mubr.bf16.mxu0 0
        %991 = vmatmul.mubr.bf16.gmra.mxu0 %v864
        %v992 = vpop.f32.mrf.mxu0
        %v993 = vadd.f32 %v900, %v992
        %v994 = vpop.f32.mrf.mxu0
        %v995 = vpop.f32.mrf.mxu0
        %v996 = vadd.f32 %v900, %v995
        %v997 = vpop.f32.mrf.mxu0
        %998 = vmatprep.mubr.bf16.mxu0 0
        %999 = vmatmul.mubr.bf16.gmra.mxu0 %v865
        %v1000 = vpop.f32.mrf.mxu0
        %v1001 = vadd.f32 %v900, %v1000
        %v1002 = vpop.f32.mrf.mxu0
        %v1003 = vpop.f32.mrf.mxu0
        %v1004 = vadd.f32 %v900, %v1003
        %v1005 = vpop.f32.mrf.mxu0
        %1006 = vmatprep.mubr.bf16.mxu0 0
        %1007 = vmatmul.mubr.bf16.gmra.mxu0 %v866
        %v1008 = vpop.f32.mrf.mxu0
        %v1009 = vadd.f32 %v900, %v1008
        %v1010 = vpop.f32.mrf.mxu0
        %v1011 = vpop.f32.mrf.mxu0
        %v1012 = vadd.f32 %v900, %v1011
        %v1013 = vpop.f32.mrf.mxu0
        %1014 = vmatprep.mubr.bf16.mxu0 0
        %1015 = vmatmul.mubr.bf16.gmra.mxu0 %v867
        %v1016 = vpop.f32.mrf.mxu0
        %v1017 = vadd.f32 %v900, %v1016
        %v1018 = vpop.f32.mrf.mxu0
        %v1019 = vpop.f32.mrf.mxu0
        %v1020 = vadd.f32 %v900, %v1019
        %v1021 = vpop.f32.mrf.mxu0
        %1022 = vmatprep.mubr.bf16.mxu0 0
        %1023 = vmatmul.mubr.bf16.gmra.mxu0 %v868
        %v1024 = vpop.f32.mrf.mxu0
        %v1025 = vadd.f32 %v900, %v1024
        %v1026 = vpop.f32.mrf.mxu0
        %v1027 = vpop.f32.mrf.mxu0
        %v1028 = vadd.f32 %v900, %v1027
        %v1029 = vpop.f32.mrf.mxu0
        %1030 = vmatprep.mubr.bf16.mxu0 0
        %1031 = vmatmul.mubr.bf16.gmra.mxu0 %v869
        %v1032 = vpop.f32.mrf.mxu0
        %v1033 = vadd.f32 %v900, %v1032
        %v1034 = vpop.f32.mrf.mxu0
        %v1035 = vpop.f32.mrf.mxu0
        %v1036 = vadd.f32 %v900, %v1035
        %v1037 = vpop.f32.mrf.mxu0
        %1038 = vmatprep.mubr.bf16.mxu0 0
        %1039 = vmatmul.mubr.bf16.gmra.mxu0 %v870
        %v1040 = vpop.f32.mrf.mxu0
        %v1041 = vadd.f32 %v900, %v1040
        %v1042 = vpop.f32.mrf.mxu0
        %v1043 = vpop.f32.mrf.mxu0
        %v1044 = vadd.f32 %v900, %v1043
        %v1045 = vpop.f32.mrf.mxu0
        %1046 = vmatprep.mubr.bf16.mxu0 0
        %1047 = vmatmul.mubr.bf16.gmra.mxu0 %v871
        %v1048 = vpop.f32.mrf.mxu0
        %v1049 = vadd.f32 %v900, %v1048
        %v1050 = vpop.f32.mrf.mxu0
        %v1051 = vpop.f32.mrf.mxu0
        %v1052 = vadd.f32 %v900, %v1051
        %v1053 = vpop.f32.mrf.mxu0
        %1054 = vmatprep.mubr.bf16.mxu0 0
        %1055 = vmatmul.mubr.bf16.gmra.mxu0 %v872
        %v1056 = vpop.f32.mrf.mxu0
        %v1057 = vadd.f32 %v900, %v1056
        %v1058 = vpop.f32.mrf.mxu0
        %v1059 = vpop.f32.mrf.mxu0
        %v1060 = vadd.f32 %v900, %v1059
        %v1061 = vpop.f32.mrf.mxu0
        %1062 = vmatprep.mubr.bf16.mxu0 0
        %1063 = vmatmul.mubr.bf16.gmra.mxu0 %v873
        %v1064 = vpop.f32.mrf.mxu0
        %v1065 = vadd.f32 %v900, %v1064
        %v1066 = vpop.f32.mrf.mxu0
        %v1067 = vpop.f32.mrf.mxu0
        %v1068 = vadd.f32 %v900, %v1067
        %v1069 = vpop.f32.mrf.mxu0
        %1070 = vmatprep.mubr.bf16.mxu0 0
        %1071 = vmatmul.mubr.bf16.gmra.mxu0 %v874
        %v1072 = vpop.f32.mrf.mxu0
        %v1073 = vadd.f32 %v900, %v1072
        %v1074 = vpop.f32.mrf.mxu0
        %v1075 = vpop.f32.mrf.mxu0
        %v1076 = vadd.f32 %v900, %v1075
        %v1077 = vpop.f32.mrf.mxu0
        %1078 = vmatprep.mubr.bf16.mxu0 0
        %1079 = vmatmul.mubr.bf16.gmra.mxu0 %v875
        %v1080 = vpop.f32.mrf.mxu0
        %v1081 = vadd.f32 %v900, %v1080
        %v1082 = vpop.f32.mrf.mxu0
        %v1083 = vpop.f32.mrf.mxu0
        %v1084 = vadd.f32 %v900, %v1083
        %v1085 = vpop.f32.mrf.mxu0
        %1086 = vmatprep.mubr.bf16.mxu0 0
        %1087 = vmatmul.mubr.bf16.gmra.mxu0 %v876
        %v1088 = vpop.f32.mrf.mxu0
        %v1089 = vadd.f32 %v900, %v1088
        %v1090 = vpop.f32.mrf.mxu0
        %v1091 = vpop.f32.mrf.mxu0
        %v1092 = vadd.f32 %v900, %v1091
        %v1093 = vpop.f32.mrf.mxu0
        %1094 = vmatprep.mubr.bf16.mxu0 0
        %1095 = vmatmul.mubr.bf16.gmra.mxu0 %v877
        %v1096 = vpop.f32.mrf.mxu0
        %v1097 = vadd.f32 %v900, %v1096
        %v1098 = vpop.f32.mrf.mxu0
        %v1099 = vpop.f32.mrf.mxu0
        %v1100 = vadd.f32 %v900, %v1099
        %v1101 = vpop.f32.mrf.mxu0
        %1102 = vmatprep.mubr.bf16.mxu0 0
        %1103 = vmatmul.mubr.bf16.gmra.mxu0 %v878
        %v1104 = vpop.f32.mrf.mxu0
        %v1105 = vadd.f32 %v900, %v1104
        %v1106 = vpop.f32.mrf.mxu0
        %v1107 = vpop.f32.mrf.mxu0
        %v1108 = vadd.f32 %v900, %v1107
        %v1109 = vpop.f32.mrf.mxu0
        %1110 = vdwg.mxu0
        %v1111 = vpack.c.bf16 %v988, %v985
        %v1112 = vpack.c.bf16 %v996, %v993
        %v1113 = vpack.c.bf16 %v1004, %v1001
        %v1114 = vpack.c.bf16 %v1012, %v1009
        %v1115 = vpack.c.bf16 %v1020, %v1017
        %v1116 = vpack.c.bf16 %v1028, %v1025
        %v1117 = vpack.c.bf16 %v1036, %v1033
        %v1118 = vpack.c.bf16 %v1044, %v1041
        %v1119 = vpack.c.bf16 %v1052, %v1049
        %v1120 = vpack.c.bf16 %v1060, %v1057
        %v1121 = vpack.c.bf16 %v1068, %v1065
        %v1122 = vpack.c.bf16 %v1076, %v1073
        %v1123 = vpack.c.bf16 %v1084, %v1081
        %v1124 = vpack.c.bf16 %v1092, %v1089
        %v1125 = vpack.c.bf16 %v1100, %v1097
        %v1126 = vpack.c.bf16 %v1108, %v1105
        %v1143 = vunpack.c.l.b16 %v1111
        %v1144 = vunpack.c.h.b16 %v1111
        %v1145 = vunpack.c.l.b16 %v1112
        %v1146 = vunpack.c.h.b16 %v1112
        %v1147 = vunpack.c.l.b16 %v1113
        %v1148 = vunpack.c.h.b16 %v1113
        %v1149 = vunpack.c.l.b16 %v1114
        %v1150 = vunpack.c.h.b16 %v1114
        %v1151 = vunpack.c.l.b16 %v1115
        %v1152 = vunpack.c.h.b16 %v1115
        %v1153 = vunpack.c.l.b16 %v1116
        %v1154 = vunpack.c.h.b16 %v1116
        %v1155 = vunpack.c.l.b16 %v1117
        %v1156 = vunpack.c.h.b16 %v1117
        %v1157 = vunpack.c.l.b16 %v1118
        %v1158 = vunpack.c.h.b16 %v1118
        %v1159 = vunpack.c.l.b16 %v1119
        %v1160 = vunpack.c.h.b16 %v1119
        %v1161 = vunpack.c.l.b16 %v1120
        %v1162 = vunpack.c.h.b16 %v1120
        %v1163 = vunpack.c.l.b16 %v1121
        %v1164 = vunpack.c.h.b16 %v1121
        %v1165 = vunpack.c.l.b16 %v1122
        %v1166 = vunpack.c.h.b16 %v1122
        %v1167 = vunpack.c.l.b16 %v1123
        %v1168 = vunpack.c.h.b16 %v1123
        %v1169 = vunpack.c.l.b16 %v1124
        %v1170 = vunpack.c.h.b16 %v1124
        %v1171 = vunpack.c.l.b16 %v1125
        %v1172 = vunpack.c.h.b16 %v1125
        %v1173 = vunpack.c.l.b16 %v1126
        %v1174 = vunpack.c.h.b16 %v1126
        %v1175 = vpack.c.b16 %v1143, %v1143
        %v1176 = vpack.c.b16 %v1144, %v1144
        %v1177 = vpack.c.b16 %v1145, %v1145
        %v1178 = vpack.c.b16 %v1146, %v1146
        %v1179 = vpack.c.b16 %v1147, %v1147
        %v1180 = vpack.c.b16 %v1148, %v1148
        %v1181 = vpack.c.b16 %v1149, %v1149
        %v1182 = vpack.c.b16 %v1150, %v1150
        %v1183 = vpack.c.b16 %v1151, %v1151
        %v1184 = vpack.c.b16 %v1152, %v1152
        %v1185 = vpack.c.b16 %v1153, %v1153
        %v1186 = vpack.c.b16 %v1154, %v1154
        %v1187 = vpack.c.b16 %v1155, %v1155
        %v1188 = vpack.c.b16 %v1156, %v1156
        %v1189 = vpack.c.b16 %v1157, %v1157
        %v1190 = vpack.c.b16 %v1158, %v1158
        %v1191 = vpack.c.b16 %v1159, %v1159
        %v1192 = vpack.c.b16 %v1160, %v1160
        %v1193 = vpack.c.b16 %v1161, %v1161
        %v1194 = vpack.c.b16 %v1162, %v1162
        %v1195 = vpack.c.b16 %v1163, %v1163
        %v1196 = vpack.c.b16 %v1164, %v1164
        %v1197 = vpack.c.b16 %v1165, %v1165
        %v1198 = vpack.c.b16 %v1166, %v1166
        %v1199 = vpack.c.b16 %v1167, %v1167
        %v1200 = vpack.c.b16 %v1168, %v1168
        %v1201 = vpack.c.b16 %v1169, %v1169
        %v1202 = vpack.c.b16 %v1170, %v1170
        %v1203 = vpack.c.b16 %v1171, %v1171
        %v1204 = vpack.c.b16 %v1172, %v1172
        %v1205 = vpack.c.b16 %v1173, %v1173
        %v1206 = vpack.c.b16 %v1174, %v1174
        %1239 = vst [vmem:[%s272] sm:$0xf] %v1175
        %1240 = vst [vmem:[%s272 + $0x4] sm:$0xf] %v1176
        %1241 = vst [vmem:[%s272 + $0x8] sm:$0xf] %v1177
        %1242 = vst [vmem:[%s272 + $0xc] sm:$0xf] %v1178
        %1243 = vst [vmem:[%s272 + $0x10] sm:$0xf] %v1179
        %1244 = vst [vmem:[%s272 + $0x14] sm:$0xf] %v1180
        %1245 = vst [vmem:[%s272 + $0x18] sm:$0xf] %v1181
        %1246 = vst [vmem:[%s272 + $0x1c] sm:$0xf] %v1182
        %1247 = vst [vmem:[%s272 + $0x20] sm:$0xf] %v1183
        %1248 = vst [vmem:[%s272 + $0x24] sm:$0xf] %v1184
        %1249 = vst [vmem:[%s272 + $0x28] sm:$0xf] %v1185
        %1250 = vst [vmem:[%s272 + $0x2c] sm:$0xf] %v1186
        %1251 = vst [vmem:[%s272 + $0x30] sm:$0xf] %v1187
        %1252 = vst [vmem:[%s272 + $0x34] sm:$0xf] %v1188
        %1253 = vst [vmem:[%s272 + $0x38] sm:$0xf] %v1189
        %1254 = vst [vmem:[%s272 + $0x3c] sm:$0xf] %v1190
        %1255 = vst [vmem:[%s272 + $0x40] sm:$0xf] %v1191
        %1256 = vst [vmem:[%s272 + $0x44] sm:$0xf] %v1192
        %1257 = vst [vmem:[%s272 + $0x48] sm:$0xf] %v1193
        %1258 = vst [vmem:[%s272 + $0x4c] sm:$0xf] %v1194
        %1259 = vst [vmem:[%s272 + $0x50] sm:$0xf] %v1195
        %1260 = vst [vmem:[%s272 + $0x54] sm:$0xf] %v1196
        %1261 = vst [vmem:[%s272 + $0x58] sm:$0xf] %v1197
        %1262 = vst [vmem:[%s272 + $0x5c] sm:$0xf] %v1198
        %1263 = vst [vmem:[%s272 + $0x60] sm:$0xf] %v1199
        %1264 = vst [vmem:[%s272 + $0x64] sm:$0xf] %v1200
        %1265 = vst [vmem:[%s272 + $0x68] sm:$0xf] %v1201
        %1266 = vst [vmem:[%s272 + $0x6c] sm:$0xf] %v1202
        %1267 = vst [vmem:[%s272 + $0x70] sm:$0xf] %v1203
        %1268 = vst [vmem:[%s272 + $0x74] sm:$0xf] %v1204
        %1269 = vst [vmem:[%s272 + $0x78] sm:$0xf] %v1205
        %1270 = vst [vmem:[%s272 + $0x7c] sm:$0xf] %v1206
        %s1271 = sand.u32 %s181, 1
        %s1272 = scalar_lea.sflag [#allocation3], %s1271
        %s1273 = sand.u32 %s181, 1
        %s1274 = smul.addr %s1273, 128
        %s1275 = scalar_lea.vmem [#allocation2], %s1274
        // Predicated region
        $region49: #{tpu_custom_call.1} parent=47 // pred_check
          %p1276 = pneg %p191
        $region50: #{tpu_custom_call.1} parent=47 // pred_check_branch
          %1278 = sbr.rel (%p1276) target = $region52
        $region51: #{tpu_custom_call.1} parent=47 // pred_region
          %s1279 = smul.u32 32, %s21
          %s1281 = ssub.s32 2048, 2048
          %1282 = vsyncadd %s1272, %s1281
          %s1283 = smul.addr %s1279, 64
          %s1284 = scalar_lea.hbm %s7, %s1283
          %s1285 = sshll.u32 %s1275, 4
          %s1286 = int_to_ptr.vmem [resolvable:$true] %s1285
          %1291 = dma.vmem_to_hbm [thread:$0]  %s1286, 2048, %s1284, %s1272, 64, 64, 4
        $region52: #{tpu_custom_call.1} parent=47 // pred_fallthru
          _
      $region48: #{tpu_custom_call.1} parent=5 // pred_fallthru
        _
      %p1292 = scmp.le.s32.totalorder 2, %s16
      // Predicated region
      $region53: #{tpu_custom_call.1} parent=5 // pred_check
        %p1293 = pneg %p1292
      $region54: #{tpu_custom_call.1} parent=5 // pred_check_branch
        %1295 = sbr.rel (%p1293) target = $region56
      $region55: #{tpu_custom_call.1} parent=5 // pred_region
        %s1296 = ssub.s32 %s16, 2
        // Predicated region
        $region57: #{tpu_custom_call.1} parent=55 // pred_check
          %p1297 = pneg %p197
        $region58: #{tpu_custom_call.1} parent=55 // pred_check_branch
          %1299 = sbr.rel (%p1297) target = $region60
        $region59: #{tpu_custom_call.1} parent=55 // pred_region
          %s1300 = sand.u32 %s182, 1
          %s1301 = scalar_lea.sflag [#allocation3], %s1300
          %s1302 = sand.u32 %s182, 1
          %s1303 = smul.addr %s1302, 128
          %s1304 = scalar_lea.vmem [#allocation2], %s1303
          %1305 = dma.done %s1301, 2048
        $region60: #{tpu_custom_call.1} parent=55 // pred_fallthru
          _
      $region56: #{tpu_custom_call.1} parent=5 // pred_fallthru
        _
    $region6: #{tpu_custom_call.1} parent=1 // loop_footer
      %s20 = sadd.s32 1, %s16
    $region7: #{tpu_custom_call.1} parent=1 // loop_footer_branch
      %15 = sbr.rel target = $region3
    $region8: #{tpu_custom_call.1} parent=1 // loop_exit
      _
    %1306 = vsyncpa [#allocation3], 1
    %s1307 = scalar_lea.sflag [#allocation3], 1
    %1308 = vsyncpa %s1307, 1

</llo_original>
